<compile_context>
chip_gen: v7x
topology: tpu7x:2x2x1
jax: 0.10.0
libtpu: 0.0.40
codegen_flags: <defaults>
</compile_context>

<pallas_src>
import math

import jax
import jax.numpy as jnp
from jax.experimental import pallas as pl
from jax.experimental.pallas import tpu as pltpu


def _gelu_tanh(x):
    # GELU with tanh approximation (matches nn.GELU(approximate='tanh')); keep in f32.
    c = math.sqrt(2.0 / math.pi)
    return 0.5 * x * (1.0 + jnp.tanh(c * (x + 0.044715 * x * x * x)))


def _pad_axis(x, axis, mult):
    size = x.shape[axis]
    pad = (-size) % mult
    if pad == 0:
        return x
    widths = [(0, 0)] * x.ndim
    widths[axis] = (0, pad)
    return jnp.pad(x, widths)


def caption_embedder_kernel(row_ref,   # scalar prefetch: (B,) int32 gather rows (used by index_map only)
                            cap_ref,   # (1, tq, Cp)  caption row OR uncond row (already gathered by DMA)
                            w1_ref,    # (Cp, Hp)     fc1 weight
                            w2_ref,    # (Hp, tn)     fc2 weight columns
                            out_ref):  # (1, tq, tn)
    del row_ref  # consumed by the caption index_map: token_drop is done at DMA time

    # fc1 (no bias): MXU operands in the weight dtype (bf16 if requested), f32 accumulation.
    x = cap_ref[0].astype(w1_ref.dtype)                               # (tq, Cp)
    h = jnp.dot(x, w1_ref[...], preferred_element_type=jnp.float32)  # (tq, Hp) f32

    # GELU(tanh) stays in f32 (VPU + EUP tanh).
    h = _gelu_tanh(h)

    # fc2 (no bias)
    o = jnp.dot(h.astype(w2_ref.dtype), w2_ref[...],
                preferred_element_type=jnp.float32)                   # (tq, tn) f32
    out_ref[0] = o.astype(out_ref.dtype)


def caption_embedder(caption, drop_ids, uncond_embedding, w1, w2, *,
                     weight_dtype=None, tq=None, tn=None):
    """caption: (B,T,C); drop_ids: (B,) int32 (0/1); uncond: (T,C); w1: (C,H); w2: (H,H).

    weight_dtype=jnp.bfloat16 feeds the MXU bf16 operands (weights + activations) while
    keeping f32 accumulation and f32 GELU; output dtype follows caption.dtype.
    """
    B, T, C = caption.shape
    H = w1.shape[1]
    assert w1.shape == (C, H) and w2.shape == (H, H)
    assert uncond_embedding.shape == (T, C)
    out_dtype = caption.dtype

    if weight_dtype is not None:
        w1 = w1.astype(weight_dtype)
        w2 = w2.astype(weight_dtype)

    # token_drop at DMA time: append uncond as row B; the caption index_map picks row
    # rows[b] (= b, or B if dropped) so dropped batch elements never DMA their caption.
    cap_ext = jnp.concatenate(
        [caption, uncond_embedding[None].astype(caption.dtype)], axis=0)   # (B+1, T, C)

    # Pad minor dims to lane/sublane-friendly sizes (no-op for realistic DiT shapes).
    def _sublane_mult(dt):
        return 8 * max(1, 4 // jnp.dtype(dt).itemsize)

    cap_ext = _pad_axis(_pad_axis(cap_ext, 1, _sublane_mult(cap_ext.dtype)), 2, 128)
    w1p = _pad_axis(_pad_axis(w1, 0, 128), 1, 128)
    w2p = _pad_axis(_pad_axis(w2, 0, 128), 1, 128)
    _, T_pad, C_pad = cap_ext.shape
    H_pad = w1p.shape[1]

    tq = T_pad if tq is None else tq
    tn = H_pad if tn is None else tn
    assert T_pad % tq == 0 and H_pad % tn == 0

    # Gather row per batch element: own row, or the uncond row (index B) if dropped.
    rows = jnp.where(drop_ids != 0, B, jnp.arange(B, dtype=jnp.int32))
    rows = jnp.clip(rows, 0, B).astype(jnp.int32)

    grid = (B, T_pad // tq, H_pad // tn)

    grid_spec = pltpu.PrefetchScalarGridSpec(
        num_scalar_prefetch=1,
        grid=grid,
        in_specs=[
            # caption/uncond, gathered via the prefetched row table (token_drop at DMA time)
            pl.BlockSpec((1, tq, C_pad), lambda b, t, n, r: (r[b], t, 0)),
            pl.BlockSpec((C_pad, H_pad), lambda b, t, n, r: (0, 0)),   # fc1 weight (constant index)
            pl.BlockSpec((H_pad, tn),    lambda b, t, n, r: (0, n)),   # fc2 weight columns
        ],
        out_specs=pl.BlockSpec((1, tq, tn), lambda b, t, n, r: (b, t, n)),
    )

    itm = lambda a: jnp.dtype(a.dtype).itemsize
    # Advisory scheduling hint for XLA around the custom call.
    cost = pl.CostEstimate(
        flops=int(2 * B * T * C * H + 2 * B * T * H * H),
        transcendentals=int(B * T * H),
        bytes_accessed=int(caption.size * itm(caption)
                           + uncond_embedding.size * itm(uncond_embedding)
                           + w1.size * itm(w1) + w2.size * itm(w2)
                           + B * T * H * jnp.dtype(out_dtype).itemsize),
    )

    # VMEM budget: double-buffered caption/out blocks + double-buffered weight blocks +
    # intermediates; never below the default 32 MiB, never above 128 MiB.
    est = (2 * tq * C_pad * itm(cap_ext)
           + 2 * (C_pad * H_pad + H_pad * tn) * itm(w1p)
           + 2 * tq * tn * jnp.dtype(out_dtype).itemsize
           + tq * (H_pad + tn) * 4)
    vmem_limit = int(min(max(2 * est, 32 * 1024 * 1024), 128 * 1024 * 1024))

    out_padded = pl.pallas_call(
        caption_embedder_kernel,
        out_shape=jax.ShapeDtypeStruct((B, T_pad, H_pad), out_dtype),
        grid_spec=grid_spec,
        compiler_params=pltpu.CompilerParams(
            dimension_semantics=("parallel", "parallel", "parallel"),
            vmem_limit_bytes=vmem_limit),
        cost_estimate=cost,
    )(rows, cap_ext, w1p, w2p)

    return out_padded[:, :T, :H]


def caption_embedder_forward(caption, train, uncond_prob, uncond_embedding,
                             w1, w2, key=None, force_drop_ids=None,
                             weight_dtype=None):
    """Mirrors CaptionEmbedder.forward semantics (drop mask generated in the wrapper)."""
    B = caption.shape[0]
    use_dropout = uncond_prob > 0
    if (train and use_dropout) or (force_drop_ids is not None):
        if force_drop_ids is None:
            drop = (jax.random.uniform(key, (B,)) < uncond_prob).astype(jnp.int32)
        else:
            drop = (force_drop_ids == 1).astype(jnp.int32)
    else:
        drop = jnp.zeros((B,), dtype=jnp.int32)
    return caption_embedder(caption, drop, uncond_embedding, w1, w2,
                            weight_dtype=weight_dtype)


def _reference(caption, drop, uncond_embedding, w1, w2, weight_dtype=None):
    x = jnp.where(drop[:, None, None] == 1, uncond_embedding[None], caption)
    if weight_dtype is not None:
        w1 = w1.astype(weight_dtype)
        w2 = w2.astype(weight_dtype)
        x = x.astype(weight_dtype)
    h = jnp.dot(x, w1, preferred_element_type=jnp.float32)
    h = _gelu_tanh(h)
    o = jnp.dot(h.astype(w2.dtype), w2, preferred_element_type=jnp.float32)
    return o.astype(caption.dtype)


if __name__ == "__main__":
    B, T, C, H = 2, 8, 16, 32          # batch, token_num, in_channels, hidden_size
    uncond_prob = 0.5

    key = jax.random.PRNGKey(0)
    k_cap, k_unc, k_w1, k_w2, k_drop = jax.random.split(key, 5)

    caption = jax.random.normal(k_cap, (B, T, C), dtype=jnp.float32)
    # uncond_embedding ~ randn(token_num, in_channels) / sqrt(in_channels)
    uncond_embedding = jax.random.normal(k_unc, (T, C), dtype=jnp.float32) / math.sqrt(C)
    # Linear weights (no bias); stored as (in, out) so kernel uses x @ w
    w1 = jax.random.normal(k_w1, (C, H), dtype=jnp.float32) / math.sqrt(C)
    w2 = jax.random.normal(k_w2, (H, H), dtype=jnp.float32) / math.sqrt(H)

    # deterministic drop pattern: keep batch element 0, drop element 1
    force_drop_ids = jnp.array([0, 1], dtype=jnp.int32)
    drop = (force_drop_ids == 1).astype(jnp.int32)

    # f32 weights: tight check vs f32 reference.
    out = caption_embedder_forward(
        caption, train=True, uncond_prob=uncond_prob,
        uncond_embedding=uncond_embedding, w1=w1, w2=w2,
        key=k_drop, force_drop_ids=force_drop_ids)
    out = jax.block_until_ready(out)
    ref = _reference(caption, drop, uncond_embedding, w1, w2)
    assert out.shape == (B, T, H)
    assert jnp.allclose(out, ref, atol=1e-5, rtol=1e-5), "f32 mismatch vs reference"

    # bf16 MXU operands (f32 accumulation + f32 GELU): loose check vs matching reference.
    out_bf16 = caption_embedder_forward(
        caption, train=True, uncond_prob=uncond_prob,
        uncond_embedding=uncond_embedding, w1=w1, w2=w2,
        key=k_drop, force_drop_ids=force_drop_ids,
        weight_dtype=jnp.bfloat16)
    out_bf16 = jax.block_until_ready(out_bf16)
    ref_bf16 = _reference(caption, drop, uncond_embedding, w1, w2,
                          weight_dtype=jnp.bfloat16)
    assert jnp.allclose(out_bf16, ref_bf16, atol=2e-2, rtol=2e-2), "bf16 mismatch vs reference"

    print("KERNEL_OK")
</pallas_src>

<mosaic_0001>
module attributes {stable_mosaic.version = 11 : i64} {
  func.func @caption_embedder_kernel(%arg0: i32, %arg1: i32, %arg2: i32, %arg3: memref<2xi32, #tpu.memory_space<smem>>, %arg4: memref<1x8x128xf32, #tpu.memory_space<vmem>>, %arg5: memref<128x128xf32, #tpu.memory_space<vmem>>, %arg6: memref<128x128xf32, #tpu.memory_space<vmem>>, %arg7: memref<1x8x128xf32, #tpu.memory_space<vmem>>) attributes {dimension_semantics = [#tpu.dimension_semantics<parallel>, #tpu.dimension_semantics<parallel>, #tpu.dimension_semantics<parallel>], iteration_bounds = array<i64: 2, 1, 1>, scalar_prefetch = 1 : i64, scratch_operands = 0 : i64, tpu.core_type = #tpu.core_type<tc>, window_params = [{transform_indices = @transform_0, window_bounds = array<i64: 1, 8, 128>}, {pipeline_mode = #tpu.pipeline_mode<synchronous>, transform_indices = @transform_1, window_bounds = array<i64: 128, 128>}, {transform_indices = @transform_2, window_bounds = array<i64: 128, 128>}, {transform_indices = @transform_3, window_bounds = array<i64: 1, 8, 128>}]} {
    %c0 = arith.constant 0 : index
    %c0_0 = arith.constant 0 : index
    %c0_1 = arith.constant 0 : index
    %0 = vector.load %arg4[%c0, %c0_0, %c0_1] : memref<1x8x128xf32, #tpu.memory_space<vmem>>, vector<1x8x128xf32>
    %1 = vector.shape_cast %0 : vector<1x8x128xf32> to vector<8x128xf32>
    %c0_2 = arith.constant 0 : index
    %c0_3 = arith.constant 0 : index
    %2 = vector.load %arg5[%c0_2, %c0_3] : memref<128x128xf32, #tpu.memory_space<vmem>>, vector<128x128xf32>
    %cst = arith.constant dense<0.000000e+00> : vector<8x128xf32>
    %3 = tpu.matmul %1, %2, %cst {dimension_numbers = #tpu.dot_dimension_numbers<[1], [0], [0], [1], [0, 0, 1, 1], [], []>} : vector<8x128xf32>, vector<128x128xf32>, vector<8x128xf32> -> vector<8x128xf32>
    %cst_4 = arith.constant 5.000000e-01 : f32
    %4 = vector.broadcast %cst_4 : f32 to vector<8x128xf32>
    %5 = arith.mulf %4, %3 : vector<8x128xf32>
    %cst_5 = arith.constant 4.471500e-02 : f32
    %6 = vector.broadcast %cst_5 : f32 to vector<8x128xf32>
    %7 = arith.mulf %6, %3 : vector<8x128xf32>
    %8 = arith.mulf %7, %3 : vector<8x128xf32>
    %9 = arith.mulf %8, %3 : vector<8x128xf32>
    %10 = arith.addf %3, %9 : vector<8x128xf32>
    %cst_6 = arith.constant 0.797884583 : f32
    %11 = vector.broadcast %cst_6 : f32 to vector<8x128xf32>
    %12 = arith.mulf %11, %10 : vector<8x128xf32>
    %13 = math.tanh %12 : vector<8x128xf32>
    %cst_7 = arith.constant 1.000000e+00 : f32
    %14 = vector.broadcast %cst_7 : f32 to vector<8x128xf32>
    %15 = arith.addf %14, %13 : vector<8x128xf32>
    %16 = arith.mulf %5, %15 : vector<8x128xf32>
    %c0_8 = arith.constant 0 : index
    %c0_9 = arith.constant 0 : index
    %17 = vector.load %arg6[%c0_8, %c0_9] : memref<128x128xf32, #tpu.memory_space<vmem>>, vector<128x128xf32>
    %cst_10 = arith.constant dense<0.000000e+00> : vector<8x128xf32>
    %18 = tpu.matmul %16, %17, %cst_10 {dimension_numbers = #tpu.dot_dimension_numbers<[1], [0], [0], [1], [0, 0, 1, 1], [], []>} : vector<8x128xf32>, vector<128x128xf32>, vector<8x128xf32> -> vector<8x128xf32>
    %c0_11 = arith.constant 0 : index
    %c0_12 = arith.constant 0 : index
    %c0_13 = arith.constant 0 : index
    %19 = vector.load %arg7[%c0_11, %c0_12, %c0_13] : memref<1x8x128xf32, #tpu.memory_space<vmem>>, vector<1x8x128xf32>
    %20 = vector.shape_cast %19 : vector<1x8x128xf32> to vector<8x128xf32>
    %21 = vector.shape_cast %18 : vector<8x128xf32> to vector<1x8x128xf32>
    tpu.vector_store %arg7[%c0_11, %c0_12, %c0_13], %21 {strides = array<i32>} : memref<1x8x128xf32, #tpu.memory_space<vmem>>, vector<1x8x128xf32>,
    return
  }
  func.func @transform_0(%arg0: i32, %arg1: i32, %arg2: i32, %arg3: memref<2xi32, #tpu.memory_space<smem>>) -> (i32, i32, i32) {
    %0 = arith.index_cast %arg0 : i32 to index
    %1 = memref.load %arg3[%0] : memref<2xi32, #tpu.memory_space<smem>>
    %c0_i32 = arith.constant 0 : i32
    %c0_i32_0 = arith.constant 0 : i32
    return %1, %arg1, %c0_i32 : i32, i32, i32
  }
  func.func @transform_1(%arg0: i32, %arg1: i32, %arg2: i32, %arg3: memref<2xi32, #tpu.memory_space<smem>>) -> (i32, i32) {
    %c0_i32 = arith.constant 0 : i32
    %c0_i32_0 = arith.constant 0 : i32
    %c0_i32_1 = arith.constant 0 : i32
    return %c0_i32, %c0_i32_0 : i32, i32
  }
  func.func @transform_2(%arg0: i32, %arg1: i32, %arg2: i32, %arg3: memref<2xi32, #tpu.memory_space<smem>>) -> (i32, i32) {
    %c0_i32 = arith.constant 0 : i32
    %c0_i32_0 = arith.constant 0 : i32
    return %c0_i32, %arg2 : i32, i32
  }
  func.func @transform_3(%arg0: i32, %arg1: i32, %arg2: i32, %arg3: memref<2xi32, #tpu.memory_space<smem>>) -> (i32, i32, i32) {
    %c0_i32 = arith.constant 0 : i32
    return %arg0, %arg1, %arg2 : i32, i32, i32
  }
}

</mosaic_0001>

<llo_original>
// kernel: tpu_custom_call.1
$region0: #{tpu_custom_call.1}
  #allocation0 [shape = 'u32[]', space=smem, size = 0x4, offset = 0x4, fixed_abs, tag = 'smem constant byte address 0x4 - core index']
  #allocation1 [shape = 'u32[144,128]{1,0:T(1,128)}', space=vmem, size = 0x12000, scoped, tag = 'internal scratch']
  #allocation2 [shape = 's32[1]{0}', space=sflag, size = 0x4, scoped, tag = 'scoped memory for tpu_custom_call.1']
  #allocation3 [shape = 'u8[512]{0}', space=smem, size = 0x200, scoped, tag = 'prefetched SMEM operand 0']
  %s0 = inlined_call_operand.hbm [shape: s32[2], index: 0, kind: input, shape index: {}]
  %s1 = inlined_call_operand.hbm [shape: f32[3,8,128], index: 1, kind: input, shape index: {}]
  %s2 = inlined_call_operand.hbm [shape: f32[128,128], index: 2, kind: input, shape index: {}]
  %s3 = inlined_call_operand.hbm [shape: f32[128,128], index: 3, kind: input, shape index: {}]
  %s4 = inlined_call_operand.hbm [shape: f32[2,8,128], index: 4, kind: output, shape index: {}]
  %s5 = sld [smem:[#allocation0]]
  $region57: #{tpu_custom_call.1} parent=0
    _
  %s7 = ssub.s32 1, %s5
  %s8 = scalar_select 0, %s7, %s5
  %10 = dma.hbm_to_smem %s0, 16, [#allocation3], [#allocation2]
  %11 = dma.done [#allocation2], 16
  %12 = sfence
  $region1: #{tpu_custom_call.1} parent=0
    #allocation4 [shape = 'u8[8192]{0}', space=vmem, size = 0x2000, scoped, tag = 'input window, operand 1']
    #allocation5 [shape = 's32[2]{0}', space=sflag, size = 0x8, scoped, tag = 'scoped memory for tpu_custom_call.1']
    #allocation6 [shape = 's32[2]{0}', space=sflag, size = 0x8, scoped, tag = 'scoped memory for tpu_custom_call.1']
    #allocation7 [shape = 'u8[65536]{0}', space=vmem, size = 0x10000, scoped, tag = 'input window, operand 2, single buffered']
    #allocation8 [shape = 's32[1]{0}', space=sflag, size = 0x4, scoped, tag = 'scoped memory for tpu_custom_call.1']
    #allocation9 [shape = 'u8[65536]{0}', space=vmem, size = 0x10000, scoped, tag = 'input window, operand 3, single buffered']
    #allocation10 [shape = 'u8[8192]{0}', space=vmem, size = 0x2000, scoped, tag = 'output window, operand 0']
    %13 = vsyncpa [#allocation5], 0
    %s14 = scalar_lea.sflag [#allocation5], 1
    %15 = vsyncpa %s14, 0
    %16 = vsyncpa [#allocation8], 0
    %17 = vsyncpa [#allocation6], 0
    %s18 = scalar_lea.sflag [#allocation6], 1
    %19 = vsyncpa %s18, 0
    loop: start=0, step=1, limit=4
    $region2: #{tpu_custom_call.1} parent=1 // loop_pre_header
      _
    $region3: #{tpu_custom_call.1} parent=1 // loop_header
      %s21 = sphi 0, %s25
      %p22 = scmp.ge.s32.totalorder %s21, 4
      %s28 = sphi 0, %s47
      %s29 = sphi 0, %s43
      %s30 = sphi 0, %s39
      %s31 = sphi 0, %s28
      %s32 = sphi 0, %s29
      %s33 = sphi 0, %s30
      %s34 = sphi 0, %s31
      %s35 = sphi 0, %s32
      %s36 = sphi 0, %s33
      %s54 = sphi 0, %s56
      %s57 = sphi 0, %s54
      %s58 = sphi 0, %s57
      %s74 = sphi 0, %s58
      %s78 = sphi 0, %s78
      %s80 = sphi 0, %s78
      %s81 = sphi 0, %s80
      %s95 = sphi 0, %s81
      %s101 = sphi 0, %s103
      %s104 = sphi 0, %s101
      %s105 = sphi 0, %s104
      %s121 = sphi 0, %s105
      %s131 = sphi 0, %s133
      %s134 = sphi 0, %s131
      %s135 = sphi 0, %s134
      %s151 = sphi 0, %s135
    $region4: #{tpu_custom_call.1} parent=1 // loop_header_branch
      %24 = sbr.rel (%p22) target = $region8
    $region5: #{tpu_custom_call.1} parent=1 // loop_body
      %s26 = ssub.s32 %s21, 1
      %s27 = ssub.s32 %s21, 2
      %s37 = sadd.s32 1, %s30
      %p38 = scmp.ge.s32.totalorder %s37, 1
      %s39 = scalar_select %p38, 0, %s37
      %s40 = sadd.s32 1, %s29
      %s41 = scalar_select %p38, %s40, %s29
      %p42 = scmp.ge.s32.totalorder %s41, 1
      %s43 = scalar_select %p42, 0, %s41
      %s44 = sadd.s32 1, %s28
      %s45 = scalar_select %p42, %s44, %s28
      %p46 = scmp.ge.s32.totalorder %s45, 2
      %s47 = scalar_select %p46, 0, %s45
      %s48 = sld [smem:[#allocation3 + %s28]]
      %s49 = sld [smem:[#allocation3 + %s47]]
      %s50 = ssub.s32 %s48, %s49
      %s51 = ssub.s32 %s29, %s43
      %s52 = sor.u32 %s50, %s51
      %p53 = scmp.eq.s32.totalorder %s52, 0
      %s55 = sadd.s32 %s54, 1
      %s56 = scalar_select %p53, %s54, %s55
      %p59 = pneg %p53
      %p60 = scmp.eq.s32.totalorder %s21, 1
      %p61 = por %p59, %p60
      %p62 = scmp.ne.s32.totalorder %s54, %s57
      %p63 = scmp.eq.s32.totalorder %s21, 0
      %p64 = por %p62, %p63
      %p65 = scmp.ne.s32.totalorder %s54, %s57
      %p66 = scmp.eq.s32.totalorder %s26, 1
      %p67 = por %p65, %p66
      %p68 = scmp.ne.s32.totalorder %s57, %s58
      %p69 = scmp.eq.s32.totalorder %s26, 0
      %p70 = por %p68, %p69
      %p71 = scmp.ne.s32.totalorder %s57, %s58
      %p72 = scmp.eq.s32.totalorder %s27, 1
      %p73 = por %p71, %p72
      %p75 = scmp.ne.s32.totalorder %s58, %s74
      %p76 = scmp.eq.s32.totalorder %s27, 0
      %p77 = por %p75, %p76
      %s79 = sadd.s32 %s78, 1
      %p82 = scmp.eq.s32.totalorder %s21, 1
      %p83 = scmp.ne.s32.totalorder %s78, %s80
      %p84 = scmp.eq.s32.totalorder %s21, 0
      %p85 = por %p83, %p84
      %p86 = scmp.ne.s32.totalorder %s78, %s80
      %p87 = scmp.eq.s32.totalorder %s26, 1
      %p88 = por %p86, %p87
      %p89 = scmp.ne.s32.totalorder %s80, %s81
      %p90 = scmp.eq.s32.totalorder %s26, 0
      %p91 = por %p89, %p90
      %p92 = scmp.ne.s32.totalorder %s80, %s81
      %p93 = scmp.eq.s32.totalorder %s27, 1
      %p94 = por %p92, %p93
      %p96 = scmp.ne.s32.totalorder %s81, %s95
      %p97 = scmp.eq.s32.totalorder %s27, 0
      %p98 = por %p96, %p97
      %s99 = ssub.s32 %s30, %s39
      %p100 = scmp.eq.s32.totalorder %s99, 0
      %s102 = sadd.s32 %s101, 1
      %s103 = scalar_select %p100, %s101, %s102
      %p106 = pneg %p100
      %p107 = scmp.eq.s32.totalorder %s21, 1
      %p108 = por %p106, %p107
      %p109 = scmp.ne.s32.totalorder %s101, %s104
      %p110 = scmp.eq.s32.totalorder %s21, 0
      %p111 = por %p109, %p110
      %p112 = scmp.ne.s32.totalorder %s101, %s104
      %p113 = scmp.eq.s32.totalorder %s26, 1
      %p114 = por %p112, %p113
      %p115 = scmp.ne.s32.totalorder %s104, %s105
      %p116 = scmp.eq.s32.totalorder %s26, 0
      %p117 = por %p115, %p116
      %p118 = scmp.ne.s32.totalorder %s104, %s105
      %p119 = scmp.eq.s32.totalorder %s27, 1
      %p120 = por %p118, %p119
      %p122 = scmp.ne.s32.totalorder %s105, %s121
      %p123 = scmp.eq.s32.totalorder %s27, 0
      %p124 = por %p122, %p123
      %s125 = ssub.s32 %s28, %s47
      %s126 = ssub.s32 %s29, %s43
      %s127 = sor.u32 %s125, %s126
      %s128 = ssub.s32 %s30, %s39
      %s129 = sor.u32 %s127, %s128
      %p130 = scmp.eq.s32.totalorder %s129, 0
      %s132 = sadd.s32 %s131, 1
      %s133 = scalar_select %p130, %s131, %s132
      %p136 = pneg %p130
      %p137 = scmp.eq.s32.totalorder %s21, 1
      %p138 = por %p136, %p137
      %p139 = scmp.ne.s32.totalorder %s131, %s134
      %p140 = scmp.eq.s32.totalorder %s21, 0
      %p141 = por %p139, %p140
      %p142 = scmp.ne.s32.totalorder %s131, %s134
      %p143 = scmp.eq.s32.totalorder %s26, 1
      %p144 = por %p142, %p143
      %p145 = scmp.ne.s32.totalorder %s134, %s135
      %p146 = scmp.eq.s32.totalorder %s26, 0
      %p147 = por %p145, %p146
      %p148 = scmp.ne.s32.totalorder %s134, %s135
      %p149 = scmp.eq.s32.totalorder %s27, 1
      %p150 = por %p148, %p149
      %p152 = scmp.ne.s32.totalorder %s135, %s151
      %p153 = scmp.eq.s32.totalorder %s27, 0
      %p154 = por %p152, %p153
      %p155 = scmp.le.s32.totalorder 1, %s21
      %p156 = scmp.lt.s32.totalorder %s21, 3
      %p157 = pnand %p155, %p156
      %p158 = pneg %p157
      // Predicated region
      $region9: #{tpu_custom_call.1} parent=5 // pred_check
        _
      $region10: #{tpu_custom_call.1} parent=5 // pred_check_branch
        %160 = sbr.rel (%p157) target = $region12
      $region11: #{tpu_custom_call.1} parent=5 // pred_region
        %s161 = ssub.s32 %s21, 1
        // Predicated region
        $region13: #{tpu_custom_call.1} parent=11 // pred_check
          %p162 = pneg %p91
        $region14: #{tpu_custom_call.1} parent=11 // pred_check_branch
          %164 = sbr.rel (%p162) target = $region16
        $region15: #{tpu_custom_call.1} parent=11 // pred_region
          %s166 = ssub.s32 2048, 2048
          %167 = vsyncadd [#allocation8], %s166
          %s168 = sshll.u32 [#allocation7], 4
          %s169 = int_to_ptr.vmem [resolvable:$true] %s168
          %174 = dma.hbm_to_vmem [thread:$0]  %s2, 2048, %s169, [#allocation8], 128, 128, 8
        $region16: #{tpu_custom_call.1} parent=11 // pred_fallthru
          _
        // Predicated region
        $region17: #{tpu_custom_call.1} parent=11 // pred_check
          %p175 = pneg %p117
        $region18: #{tpu_custom_call.1} parent=11 // pred_check_branch
          %177 = sbr.rel (%p175) target = $region20
        $region19: #{tpu_custom_call.1} parent=11 // pred_region
          %s179 = ssub.s32 2048, 2048
          %180 = vsyncadd [#allocation8], %s179
          %s181 = smul.addr %s33, 128
          %s182 = scalar_lea.hbm %s3, %s181
          %s183 = sshll.u32 [#allocation9], 4
          %s184 = int_to_ptr.vmem [resolvable:$true] %s183
          %189 = dma.hbm_to_vmem [thread:$0]  %s182, 2048, %s184, [#allocation8], 128, 128, 8
        $region20: #{tpu_custom_call.1} parent=11 // pred_fallthru
          _
      $region12: #{tpu_custom_call.1} parent=5 // pred_fallthru
        _
      %p190 = scmp.lt.s32.totalorder %s21, 2
      // Predicated region
      $region21: #{tpu_custom_call.1} parent=5 // pred_check
        %p191 = pneg %p190
      $region22: #{tpu_custom_call.1} parent=5 // pred_check_branch
        %193 = sbr.rel (%p191) target = $region24
      $region23: #{tpu_custom_call.1} parent=5 // pred_region
        // Predicated region
        $region25: #{tpu_custom_call.1} parent=23 // pred_check
          %p194 = pneg %p64
        $region26: #{tpu_custom_call.1} parent=23 // pred_check_branch
          %196 = sbr.rel (%p194) target = $region28
        $region27: #{tpu_custom_call.1} parent=23 // pred_region
          %s197 = sand.u32 %s54, 1
          %s198 = scalar_lea.sflag [#allocation5], %s197
          %s199 = sand.u32 %s54, 1
          %s200 = smul.addr %s199, 8
          %s201 = scalar_lea.vmem [#allocation4], %s200
          %s202 = sld [smem:[#allocation3 + %s28]]
          %s204 = ssub.s32 128, 128
          %205 = vsyncadd %s198, %s204
          %s206 = sadd.s32 %s29, %s202
          %s207 = smul.addr %s206, 128
          %s208 = scalar_lea.hbm %s1, %s207
          %s210 = sshll.u32 %s201, 4
          %s211 = int_to_ptr.vmem [resolvable:$true] %s210
          %213 = dma.hbm_to_vmem [thread:$0]  %s208, 128, %s211, %s198
        $region28: #{tpu_custom_call.1} parent=23 // pred_fallthru
          _
      $region24: #{tpu_custom_call.1} parent=5 // pred_fallthru
        _
      %p214 = scmp.le.s32.totalorder 1, %s21
      %p215 = scmp.lt.s32.totalorder %s21, 3
      %p216 = pnand %p214, %p215
      %p217 = pneg %p216
      // Predicated region
      $region29: #{tpu_custom_call.1} parent=5 // pred_check
        _
      $region30: #{tpu_custom_call.1} parent=5 // pred_check_branch
        %219 = sbr.rel (%p216) target = $region32
      $region31: #{tpu_custom_call.1} parent=5 // pred_region
        %s220 = ssub.s32 %s21, 1
        %s221 = sand.u32 %s57, 1
        %s222 = scalar_lea.sflag [#allocation5], %s221
        %s223 = sand.u32 %s57, 1
        %s224 = smul.addr %s223, 8
        %s225 = scalar_lea.vmem [#allocation4], %s224
        // Predicated region
        $region33: #{tpu_custom_call.1} parent=31 // pred_check
          %p226 = pneg %p70
        $region34: #{tpu_custom_call.1} parent=31 // pred_check_branch
          %228 = sbr.rel (%p226) target = $region36
        $region35: #{tpu_custom_call.1} parent=31 // pred_region
          %229 = dma.done %s222, 128
        $region36: #{tpu_custom_call.1} parent=31 // pred_fallthru
          _
        // Predicated region
        $region37: #{tpu_custom_call.1} parent=31 // pred_check
          %p230 = pneg %p91
        $region38: #{tpu_custom_call.1} parent=31 // pred_check_branch
          %232 = sbr.rel (%p230) target = $region40
        $region39: #{tpu_custom_call.1} parent=31 // pred_region
          %233 = dma.done [#allocation8], 2048
        $region40: #{tpu_custom_call.1} parent=31 // pred_fallthru
          _
        // Predicated region
        $region41: #{tpu_custom_call.1} parent=31 // pred_check
          %p234 = pneg %p117
        $region42: #{tpu_custom_call.1} parent=31 // pred_check_branch
          %236 = sbr.rel (%p234) target = $region44
        $region43: #{tpu_custom_call.1} parent=31 // pred_region
          %237 = dma.done [#allocation8], 2048
        $region44: #{tpu_custom_call.1} parent=31 // pred_fallthru
          _
        %s238 = sand.u32 %s57, 1
        %s239 = scalar_lea.sflag [#allocation5], %s238
        %s240 = sand.u32 %s57, 1
        %s241 = smul.addr %s240, 8
        %s242 = scalar_lea.vmem [#allocation4], %s241
        %p243 = pneg %p70
        %p244 = pneg %p67
        %p245 = pneg %p91
        %p246 = pneg %p88
        %p247 = pneg %p117
        %p248 = pneg %p114
        %p249 = pneg %p147
        %p250 = pneg %p144
        %s251 = sand.u32 %s134, 1
        %s252 = scalar_lea.sflag [#allocation6], %s251
        %s253 = sand.u32 %s134, 1
        %s254 = smul.addr %s253, 8
        %s255 = scalar_lea.vmem [#allocation10], %s254
        %s256 = sld [smem:[#allocation3 + %s31]]
        %v257 = vld [vmem:[%s225] sm:$0xff]
        %v258 = vld [vmem:[#allocation7] sm:$0xff]
        %v259 = vld [vmem:[#allocation7 + $0x8] sm:$0xff]
        %v260 = vld [vmem:[#allocation7 + $0x10] sm:$0xff]
        %v261 = vld [vmem:[#allocation7 + $0x18] sm:$0xff]
        %v262 = vld [vmem:[#allocation7 + $0x20] sm:$0xff]
        %v263 = vld [vmem:[#allocation7 + $0x28] sm:$0xff]
        %v264 = vld [vmem:[#allocation7 + $0x30] sm:$0xff]
        %v265 = vld [vmem:[#allocation7 + $0x38] sm:$0xff]
        %v266 = vld [vmem:[#allocation7 + $0x40] sm:$0xff]
        %v267 = vld [vmem:[#allocation7 + $0x48] sm:$0xff]
        %v268 = vld [vmem:[#allocation7 + $0x50] sm:$0xff]
        %v269 = vld [vmem:[#allocation7 + $0x58] sm:$0xff]
        %v270 = vld [vmem:[#allocation7 + $0x60] sm:$0xff]
        %v271 = vld [vmem:[#allocation7 + $0x68] sm:$0xff]
        %v272 = vld [vmem:[#allocation7 + $0x70] sm:$0xff]
        %v273 = vld [vmem:[#allocation7 + $0x78] sm:$0xff]
        %274 = vmatprep.subr.mxu0 0.0
        %275 = vmatpush1.msra.mxu0 %v258
        %276 = vmatprep.subr.mxu0 0.0
        %277 = vmatpush1.msra.mxu0 %v259
        %278 = vmatprep.subr.mxu0 0.0
        %279 = vmatpush1.msra.mxu0 %v260
        %280 = vmatprep.subr.mxu0 0.0
        %281 = vmatpush1.msra.mxu0 %v261
        %282 = vmatprep.subr.mxu0 0.0
        %283 = vmatpush1.msra.mxu0 %v262
        %284 = vmatprep.subr.mxu0 0.0
        %285 = vmatpush1.msra.mxu0 %v263
        %286 = vmatprep.subr.mxu0 0.0
        %287 = vmatpush1.msra.mxu0 %v264
        %288 = vmatprep.subr.mxu0 0.0
        %289 = vmatpush1.msra.mxu0 %v265
        %290 = vmatprep.subr.mxu0 0.0
        %291 = vmatpush1.msra.mxu0 %v266
        %292 = vmatprep.subr.mxu0 0.0
        %293 = vmatpush1.msra.mxu0 %v267
        %294 = vmatprep.subr.mxu0 0.0
        %295 = vmatpush1.msra.mxu0 %v268
        %296 = vmatprep.subr.mxu0 0.0
        %297 = vmatpush1.msra.mxu0 %v269
        %298 = vmatprep.subr.mxu0 0.0
        %299 = vmatpush1.msra.mxu0 %v270
        %300 = vmatprep.subr.mxu0 0.0
        %301 = vmatpush1.msra.mxu0 %v271
        %302 = vmatprep.subr.mxu0 0.0
        %303 = vmatpush1.msra.mxu0 %v272
        %304 = vmatprep.subr.mxu0 0.0
        %305 = vmatpush1.msra.mxu0 %v273
        %306 = vmatprep.subr.mxu0 0.0
        %307 = vmatpush1.msra.mxu0 0.0
        %308 = vmatprep.subr.mxu0 0.0
        %309 = vmatpush1.msra.mxu0 0.0
        %310 = vmatprep.subr.mxu0 0.0
        %311 = vmatpush1.msra.mxu0 0.0
        %312 = vmatprep.subr.mxu0 0.0
        %313 = vmatpush1.msra.mxu0 0.0
        %314 = vmatprep.subr.mxu0 0.0
        %315 = vmatpush1.msra.mxu0 0.0
        %316 = vmatprep.subr.mxu0 0.0
        %317 = vmatpush1.msra.mxu0 0.0
        %318 = vmatprep.subr.mxu0 0.0
        %319 = vmatpush1.msra.mxu0 0.0
        %320 = vmatprep.subr.mxu0 0.0
        %321 = vmatpush1.msra.mxu0 0.0
        %322 = vmatprep.subr.mxu0 0.0
        %323 = vmatpush1.msra.mxu0 0.0
        %324 = vmatprep.subr.mxu0 0.0
        %325 = vmatpush1.msra.mxu0 0.0
        %326 = vmatprep.subr.mxu0 0.0
        %327 = vmatpush1.msra.mxu0 0.0
        %328 = vmatprep.subr.mxu0 0.0
        %329 = vmatpush1.msra.mxu0 0.0
        %330 = vmatprep.subr.mxu0 0.0
        %331 = vmatpush1.msra.mxu0 0.0
        %332 = vmatprep.subr.mxu0 0.0
        %333 = vmatpush1.msra.mxu0 0.0
        %334 = vmatprep.subr.mxu0 0.0
        %335 = vmatpush1.msra.mxu0 0.0
        %336 = vmatprep.subr.mxu0 0.0
        %337 = vmatpush1.msra.mxu0 0.0
        %338 = vmatprep.mubr.f32.mxu0 0.0
        %339 = vmatmul.mubr.f32.gmra.mrb[0].mxu0 %v257
        %v340 = vpop.f32.mrb[0].mxu0
        %v341 = vadd.f32 0.0, %v340
        %v342 = vpop.f32.mrb[0].mxu0
        %343 = vdwg.mxu0
        %v344 = vmul.f32 %v341, 0.5
        %v345 = vmul.f32 %v341, 0.044715
        %v346 = vmul.f32 %v345, %v341
        %v347 = vmul.f32 %v346, %v341
        %v348 = vadd.f32 %v341, %v347
        %v349 = vmul.f32 %v348, 0.7978846
        %v350 = vtanh.pop %v349
        %v351 = vadd.f32 %v350, 1.0
        %v352 = vmul.f32 %v344, %v351
        %v353 = vld [vmem:[#allocation9] sm:$0xff]
        %v354 = vld [vmem:[#allocation9 + $0x8] sm:$0xff]
        %v355 = vld [vmem:[#allocation9 + $0x10] sm:$0xff]
        %v356 = vld [vmem:[#allocation9 + $0x18] sm:$0xff]
        %v357 = vld [vmem:[#allocation9 + $0x20] sm:$0xff]
        %v358 = vld [vmem:[#allocation9 + $0x28] sm:$0xff]
        %v359 = vld [vmem:[#allocation9 + $0x30] sm:$0xff]
        %v360 = vld [vmem:[#allocation9 + $0x38] sm:$0xff]
        %v361 = vld [vmem:[#allocation9 + $0x40] sm:$0xff]
        %v362 = vld [vmem:[#allocation9 + $0x48] sm:$0xff]
        %v363 = vld [vmem:[#allocation9 + $0x50] sm:$0xff]
        %v364 = vld [vmem:[#allocation9 + $0x58] sm:$0xff]
        %v365 = vld [vmem:[#allocation9 + $0x60] sm:$0xff]
        %v366 = vld [vmem:[#allocation9 + $0x68] sm:$0xff]
        %v367 = vld [vmem:[#allocation9 + $0x70] sm:$0xff]
        %v368 = vld [vmem:[#allocation9 + $0x78] sm:$0xff]
        %369 = vmatprep.subr.mxu0 0.0
        %370 = vmatpush1.msra.mxu0 %v353
        %371 = vmatprep.subr.mxu0 0.0
        %372 = vmatpush1.msra.mxu0 %v354
        %373 = vmatprep.subr.mxu0 0.0
        %374 = vmatpush1.msra.mxu0 %v355
        %375 = vmatprep.subr.mxu0 0.0
        %376 = vmatpush1.msra.mxu0 %v356
        %377 = vmatprep.subr.mxu0 0.0
        %378 = vmatpush1.msra.mxu0 %v357
        %379 = vmatprep.subr.mxu0 0.0
        %380 = vmatpush1.msra.mxu0 %v358
        %381 = vmatprep.subr.mxu0 0.0
        %382 = vmatpush1.msra.mxu0 %v359
        %383 = vmatprep.subr.mxu0 0.0
        %384 = vmatpush1.msra.mxu0 %v360
        %385 = vmatprep.subr.mxu0 0.0
        %386 = vmatpush1.msra.mxu0 %v361
        %387 = vmatprep.subr.mxu0 0.0
        %388 = vmatpush1.msra.mxu0 %v362
        %389 = vmatprep.subr.mxu0 0.0
        %390 = vmatpush1.msra.mxu0 %v363
        %391 = vmatprep.subr.mxu0 0.0
        %392 = vmatpush1.msra.mxu0 %v364
        %393 = vmatprep.subr.mxu0 0.0
        %394 = vmatpush1.msra.mxu0 %v365
        %395 = vmatprep.subr.mxu0 0.0
        %396 = vmatpush1.msra.mxu0 %v366
        %397 = vmatprep.subr.mxu0 0.0
        %398 = vmatpush1.msra.mxu0 %v367
        %399 = vmatprep.subr.mxu0 0.0
        %400 = vmatpush1.msra.mxu0 %v368
        %401 = vmatprep.subr.mxu0 0.0
        %402 = vmatpush1.msra.mxu0 0.0
        %403 = vmatprep.subr.mxu0 0.0
        %404 = vmatpush1.msra.mxu0 0.0
        %405 = vmatprep.subr.mxu0 0.0
        %406 = vmatpush1.msra.mxu0 0.0
        %407 = vmatprep.subr.mxu0 0.0
        %408 = vmatpush1.msra.mxu0 0.0
        %409 = vmatprep.subr.mxu0 0.0
        %410 = vmatpush1.msra.mxu0 0.0
        %411 = vmatprep.subr.mxu0 0.0
        %412 = vmatpush1.msra.mxu0 0.0
        %413 = vmatprep.subr.mxu0 0.0
        %414 = vmatpush1.msra.mxu0 0.0
        %415 = vmatprep.subr.mxu0 0.0
        %416 = vmatpush1.msra.mxu0 0.0
        %417 = vmatprep.subr.mxu0 0.0
        %418 = vmatpush1.msra.mxu0 0.0
        %419 = vmatprep.subr.mxu0 0.0
        %420 = vmatpush1.msra.mxu0 0.0
        %421 = vmatprep.subr.mxu0 0.0
        %422 = vmatpush1.msra.mxu0 0.0
        %423 = vmatprep.subr.mxu0 0.0
        %424 = vmatpush1.msra.mxu0 0.0
        %425 = vmatprep.subr.mxu0 0.0
        %426 = vmatpush1.msra.mxu0 0.0
        %427 = vmatprep.subr.mxu0 0.0
        %428 = vmatpush1.msra.mxu0 0.0
        %429 = vmatprep.subr.mxu0 0.0
        %430 = vmatpush1.msra.mxu0 0.0
        %431 = vmatprep.subr.mxu0 0.0
        %432 = vmatpush1.msra.mxu0 0.0
        %433 = vmatprep.mubr.f32.mxu0 0.0
        %434 = vmatmul.mubr.f32.gmra.mrb[0].mxu0 %v352
        %v435 = vpop.f32.mrb[0].mxu0
        %v436 = vadd.f32 0.0, %v435
        %v437 = vpop.f32.mrb[0].mxu0
        %438 = vdwg.mxu0
        %439 = vst [vmem:[%s255] sm:$0xff] %v436
        %s440 = sand.u32 %s134, 1
        %s441 = scalar_lea.sflag [#allocation6], %s440
        %s442 = sand.u32 %s134, 1
        %s443 = smul.addr %s442, 8
        %s444 = scalar_lea.vmem [#allocation10], %s443
        // Predicated region
        $region45: #{tpu_custom_call.1} parent=31 // pred_check
          %p445 = pneg %p144
        $region46: #{tpu_custom_call.1} parent=31 // pred_check_branch
          %447 = sbr.rel (%p445) target = $region48
        $region47: #{tpu_custom_call.1} parent=31 // pred_region
          %s449 = ssub.s32 128, 128
          %450 = vsyncadd %s441, %s449
          %s451 = sadd.s32 %s33, %s32
          %s452 = sadd.s32 %s451, %s31
          %s453 = smul.addr %s452, 128
          %s454 = scalar_lea.hbm %s4, %s453
          %s456 = sshll.u32 %s444, 4
          %s457 = int_to_ptr.vmem [resolvable:$true] %s456
          %459 = dma.vmem_to_hbm [thread:$0]  %s457, 128, %s454, %s441
        $region48: #{tpu_custom_call.1} parent=31 // pred_fallthru
          _
      $region32: #{tpu_custom_call.1} parent=5 // pred_fallthru
        _
      %p460 = scmp.le.s32.totalorder 2, %s21
      // Predicated region
      $region49: #{tpu_custom_call.1} parent=5 // pred_check
        %p461 = pneg %p460
      $region50: #{tpu_custom_call.1} parent=5 // pred_check_branch
        %463 = sbr.rel (%p461) target = $region52
      $region51: #{tpu_custom_call.1} parent=5 // pred_region
        %s464 = ssub.s32 %s21, 2
        // Predicated region
        $region53: #{tpu_custom_call.1} parent=51 // pred_check
          %p465 = pneg %p150
        $region54: #{tpu_custom_call.1} parent=51 // pred_check_branch
          %467 = sbr.rel (%p465) target = $region56
        $region55: #{tpu_custom_call.1} parent=51 // pred_region
          %s468 = sand.u32 %s135, 1
          %s469 = scalar_lea.sflag [#allocation6], %s468
          %s470 = sand.u32 %s135, 1
          %s471 = smul.addr %s470, 8
          %s472 = scalar_lea.vmem [#allocation10], %s471
          %473 = dma.done %s469, 128
        $region56: #{tpu_custom_call.1} parent=51 // pred_fallthru
          _
      $region52: #{tpu_custom_call.1} parent=5 // pred_fallthru
        _
    $region6: #{tpu_custom_call.1} parent=1 // loop_footer
      %s25 = sadd.s32 1, %s21
    $region7: #{tpu_custom_call.1} parent=1 // loop_footer_branch
      %20 = sbr.rel target = $region3
    $region8: #{tpu_custom_call.1} parent=1 // loop_exit
      _
    %474 = vsyncpa [#allocation5], 1
    %s475 = scalar_lea.sflag [#allocation5], 1
    %476 = vsyncpa %s475, 1
    %477 = vsyncpa [#allocation8], 1
    %478 = vsyncpa [#allocation6], 1
    %s479 = scalar_lea.sflag [#allocation6], 1
    %480 = vsyncpa %s479, 1

</llo_original>
